<compile_context>
chip_gen: v6e
topology: v6e:2x2x1
jax: 0.10.0
libtpu: 0.0.40
codegen_flags: <defaults>
</compile_context>

<pallas_src>
import functools
import math

import jax
import jax.numpy as jnp
import numpy as np
from jax.experimental import pallas as pl
from jax.experimental.pallas import tpu as pltpu

# Match the f32 reference math closely (applies to reference dots and to the
# dot_generals traced inside the kernels).
jax.config.update("jax_default_matmul_precision", "highest")

NEG_INF = -1e9   # additive mask fill; exp underflows to exactly 0 (== -inf fill)
LN_EPS = 1e-5


def _layer_norm(x, gamma, beta, eps=LN_EPS):
    mu = jnp.mean(x, axis=-1, keepdims=True)
    var = jnp.mean((x - mu) ** 2, axis=-1, keepdims=True)
    return (x - mu) * jax.lax.rsqrt(var + eps) * gamma + beta


def _gelu(x):
    # TODO(synk): torch F.gelu is the exact erf form; the tanh approximation is
    # used here (EUP-friendly). The reference below uses the same formula.
    return jax.nn.gelu(x, approximate=True)


# ----------------------------------------------------------------------------
# Kernel 1: token-embedding scale + positional add + LayerNorm (embedding LN).
# ----------------------------------------------------------------------------
def _embed_ln_kernel(scale, tok_ref, pos_ref, g_ref, b_ref, o_ref):
    x = tok_ref[0].astype(jnp.float32) * scale + pos_ref[...]      # (T, D)
    o_ref[0] = _layer_norm(x, g_ref[...], b_ref[...]).astype(o_ref.dtype)


def embed_ln(tok_emb, pos_emb, gamma, beta, scale):
    B, T, D = tok_emb.shape
    return pl.pallas_call(
        functools.partial(_embed_ln_kernel, scale),
        out_shape=jax.ShapeDtypeStruct((B, T, D), jnp.float32),
        grid=(B,),
        in_specs=[
            pl.BlockSpec((1, T, D), lambda b: (b, 0, 0)),
            pl.BlockSpec((T, D), lambda b: (0, 0)),
            pl.BlockSpec((1, D), lambda b: (0, 0)),
            pl.BlockSpec((1, D), lambda b: (0, 0)),
        ],
        out_specs=pl.BlockSpec((1, T, D), lambda b: (b, 0, 0)),
        compiler_params=pltpu.CompilerParams(dimension_semantics=("parallel",)),
    )(tok_emb, pos_emb, gamma, beta)


# ----------------------------------------------------------------------------
# Kernel 2: fused post-LN multi-head attention block (self- or cross-attn).
#   out = LayerNorm(x + sum_h softmax(Q_h K_h^T * s + mask) V_h W_o_h + b_o)
# Grid = (batch "parallel", head "arbitrary"); per-head output accumulated in
# a VMEM scratch, finalized (bias + residual + LN) at the last head.
# ----------------------------------------------------------------------------
def _mha_postln_kernel(scaling,
                       x_ref, kv_ref,
                       wq_ref, bq_ref, wk_ref, bk_ref, wv_ref, bv_ref,
                       wo_ref, bo_ref, mask_ref, g_ref, b_ref,
                       o_ref, acc_ref):
    h = pl.program_id(1)

    @pl.when(h == 0)
    def _():
        acc_ref[...] = jnp.zeros_like(acc_ref)

    x = x_ref[0]        # (T, D)  query source == residual (post-LN layer)
    kv = kv_ref[0]      # (S, D)  key/value source

    q = (jnp.dot(x, wq_ref[0], preferred_element_type=jnp.float32)
         + bq_ref[0]) * scaling                                        # (T, hd)
    k = jnp.dot(kv, wk_ref[0], preferred_element_type=jnp.float32) + bk_ref[0]
    v = jnp.dot(kv, wv_ref[0], preferred_element_type=jnp.float32) + bv_ref[0]

    scores = jnp.einsum("td,sd->ts", q, k,
                        preferred_element_type=jnp.float32) + mask_ref[0]
    scores = scores - jnp.max(scores, axis=-1, keepdims=True)
    p = jnp.exp(scores)
    p = p / jnp.sum(p, axis=-1, keepdims=True)

    ctx = jnp.dot(p, v, preferred_element_type=jnp.float32)            # (T, hd)
    acc_ref[...] += jnp.dot(ctx, wo_ref[0], preferred_element_type=jnp.float32)

    @pl.when(h == pl.num_programs(1) - 1)
    def _():
        y = acc_ref[...] + bo_ref[...] + x_ref[0].astype(jnp.float32)
        o_ref[0] = _layer_norm(y, g_ref[...], b_ref[...]).astype(o_ref.dtype)


def mha_block(x, kv, mask, p, scaling):
    B, T, D = x.shape
    S = kv.shape[1]
    H, _, hd = p["wq"].shape
    return pl.pallas_call(
        functools.partial(_mha_postln_kernel, scaling),
        out_shape=jax.ShapeDtypeStruct((B, T, D), jnp.float32),
        grid=(B, H),
        in_specs=[
            pl.BlockSpec((1, T, D), lambda b, h: (b, 0, 0)),   # x (residual)
            pl.BlockSpec((1, S, D), lambda b, h: (b, 0, 0)),   # kv source
            pl.BlockSpec((1, D, hd), lambda b, h: (h, 0, 0)),  # wq
            pl.BlockSpec((1, 1, hd), lambda b, h: (h, 0, 0)),  # bq
            pl.BlockSpec((1, D, hd), lambda b, h: (h, 0, 0)),  # wk
            pl.BlockSpec((1, 1, hd), lambda b, h: (h, 0, 0)),  # bk
            pl.BlockSpec((1, D, hd), lambda b, h: (h, 0, 0)),  # wv
            pl.BlockSpec((1, 1, hd), lambda b, h: (h, 0, 0)),  # bv
            pl.BlockSpec((1, hd, D), lambda b, h: (h, 0, 0)),  # wo
            pl.BlockSpec((1, D), lambda b, h: (0, 0)),         # bo
            pl.BlockSpec((1, T, S), lambda b, h: (b, 0, 0)),   # additive mask
            pl.BlockSpec((1, D), lambda b, h: (0, 0)),         # ln gamma
            pl.BlockSpec((1, D), lambda b, h: (0, 0)),         # ln beta
        ],
        out_specs=pl.BlockSpec((1, T, D), lambda b, h: (b, 0, 0)),
        scratch_shapes=[pltpu.VMEM((T, D), jnp.float32)],
        compiler_params=pltpu.CompilerParams(
            dimension_semantics=("parallel", "arbitrary")),
    )(x, kv, p["wq"], p["bq"], p["wk"], p["bk"], p["wv"], p["bv"],
      p["wo"], p["bo"], mask, p["ln_g"], p["ln_b"])


# ----------------------------------------------------------------------------
# Kernel 3: fused post-LN feed-forward block: LN(x + fc2(gelu(fc1(x)))).
# ----------------------------------------------------------------------------
def _ffn_postln_kernel(x_ref, w1_ref, b1_ref, w2_ref, b2_ref, g_ref, b_ref, o_ref):
    x = x_ref[0].astype(jnp.float32)                                   # (T, D)
    h = jnp.dot(x, w1_ref[...], preferred_element_type=jnp.float32) + b1_ref[...]
    h = _gelu(h)
    y = jnp.dot(h, w2_ref[...], preferred_element_type=jnp.float32) + b2_ref[...]
    o_ref[0] = _layer_norm(y + x, g_ref[...], b_ref[...]).astype(o_ref.dtype)


def ffn_block(x, p):
    B, T, D = x.shape
    ffn_dim = p["w1"].shape[1]
    return pl.pallas_call(
        _ffn_postln_kernel,
        out_shape=jax.ShapeDtypeStruct((B, T, D), jnp.float32),
        grid=(B,),
        in_specs=[
            pl.BlockSpec((1, T, D), lambda b: (b, 0, 0)),
            pl.BlockSpec((D, ffn_dim), lambda b: (0, 0)),
            pl.BlockSpec((1, ffn_dim), lambda b: (0, 0)),
            pl.BlockSpec((ffn_dim, D), lambda b: (0, 0)),
            pl.BlockSpec((1, D), lambda b: (0, 0)),
            pl.BlockSpec((1, D), lambda b: (0, 0)),
            pl.BlockSpec((1, D), lambda b: (0, 0)),
        ],
        out_specs=pl.BlockSpec((1, T, D), lambda b: (b, 0, 0)),
        compiler_params=pltpu.CompilerParams(dimension_semantics=("parallel",)),
    )(x, p["w1"], p["b1"], p["w2"], p["b2"], p["ln_g"], p["ln_b"])


# ----------------------------------------------------------------------------
# Full BartDecoder forward (eval mode, no cache).
# ----------------------------------------------------------------------------
def bart_decoder_forward(params, input_ids, encoder_hidden_states,
                         encoder_attention_mask, decoder_padding_mask,
                         *, embed_scale, pos_offset):
    B, T = input_ids.shape
    S = encoder_hidden_states.shape[1]
    D = params["tok_emb"].shape[1]
    H = params["layers"][0]["self_attn"]["wq"].shape[0]
    scaling = (D // H) ** (-0.5)

    # TODO(synk): the token-id gather is left to XLA (jnp.take); a scalar-
    # prefetch Element-gather kernel is not worthwhile at these table sizes.
    tok = jnp.take(params["tok_emb"], input_ids, axis=0)             # (B, T, D)
    pos = params["pos_emb"][pos_offset:pos_offset + T]               # (T, D)

    x = embed_ln(tok, pos, params["emb_ln_g"], params["emb_ln_b"], embed_scale)

    # Additive attention masks (equivalent to masked_fill(-inf) + float causal).
    causal = jnp.where(jnp.arange(T)[None, :] > jnp.arange(T)[:, None],
                       NEG_INF, 0.0).astype(jnp.float32)
    self_mask = (causal[None, :, :]
                 + jnp.where(decoder_padding_mask[:, None, :], NEG_INF, 0.0)
                 ).astype(jnp.float32)                               # (B, T, T)
    enc_pad = (encoder_attention_mask == 0)                          # invert_mask
    cross_mask = jnp.broadcast_to(
        jnp.where(enc_pad[:, None, :], NEG_INF, 0.0).astype(jnp.float32),
        (B, T, S))

    for lp in params["layers"]:
        x = mha_block(x, x, self_mask, lp["self_attn"], scaling)
        x = mha_block(x, encoder_hidden_states, cross_mask, lp["cross_attn"],
                      scaling)
        x = ffn_block(x, lp["ffn"])

    # TODO(synk): use_cache / decoder_cached_states incremental decoding,
    # output_attentions / output_hidden_states, layerdrop and dropout (eval
    # no-ops), and the normalize_before=True / add_final_layer_norm variants
    # are not implemented.
    return x


# ----------------------------------------------------------------------------
# Pure-JAX reference (same parameters, same math).
# ----------------------------------------------------------------------------
def _reference_forward(params, input_ids, enc_h, encoder_attention_mask,
                       decoder_padding_mask, *, embed_scale, pos_offset):
    B, T = input_ids.shape
    S = enc_h.shape[1]
    D = params["tok_emb"].shape[1]
    H = params["layers"][0]["self_attn"]["wq"].shape[0]
    scaling = (D // H) ** (-0.5)

    tok = jnp.take(params["tok_emb"], input_ids, axis=0)
    pos = params["pos_emb"][pos_offset:pos_offset + T]
    x = _layer_norm(tok * embed_scale + pos,
                    params["emb_ln_g"], params["emb_ln_b"])

    causal = jnp.where(jnp.arange(T)[None, :] > jnp.arange(T)[:, None],
                       NEG_INF, 0.0).astype(jnp.float32)
    self_mask = causal[None] + jnp.where(decoder_padding_mask[:, None, :],
                                         NEG_INF, 0.0)
    cross_mask = jnp.broadcast_to(
        jnp.where((encoder_attention_mask == 0)[:, None, :], NEG_INF, 0.0),
        (B, T, S))

    def attn(xq, xkv, mask, p):
        outs = []
        for b in range(B):
            acc = jnp.zeros((xq.shape[1], D), jnp.float32)
            for h in range(H):
                q = (xq[b] @ p["wq"][h] + p["bq"][h, 0]) * scaling
                k = xkv[b] @ p["wk"][h] + p["bk"][h, 0]
                v = xkv[b] @ p["wv"][h] + p["bv"][h, 0]
                s = q @ k.T + mask[b]
                pr = jax.nn.softmax(s, axis=-1)
                acc = acc + (pr @ v) @ p["wo"][h]
            y = acc + p["bo"] + xq[b]
            outs.append(_layer_norm(y, p["ln_g"], p["ln_b"]))
        return jnp.stack(outs)

    def ffn(xin, p):
        h = _gelu(xin @ p["w1"] + p["b1"])
        y = h @ p["w2"] + p["b2"]
        return _layer_norm(y + xin, p["ln_g"], p["ln_b"])

    for lp in params["layers"]:
        x = attn(x, x, self_mask, lp["self_attn"])
        x = attn(x, enc_h, cross_mask, lp["cross_attn"])
        x = ffn(x, lp["ffn"])
    return x


# ----------------------------------------------------------------------------
# Deterministic parameter construction.
# ----------------------------------------------------------------------------
def init_params(key, *, vocab, max_pos, pos_offset, D, H, ffn_dim, L):
    hd = D // H
    keys = jax.random.split(key, 4 + L)

    def rnd(k, shape, s=0.05):
        return jax.random.normal(k, shape, dtype=jnp.float32) * s

    params = {
        "tok_emb": rnd(keys[0], (vocab, D), 0.5),
        "pos_emb": rnd(keys[1], (max_pos + pos_offset, D), 0.5),
        "emb_ln_g": 1.0 + rnd(keys[2], (1, D), 0.1),
        "emb_ln_b": rnd(keys[3], (1, D), 0.1),
        "layers": [],
    }
    for l in range(L):
        lk = jax.random.split(keys[4 + l], 26)

        def attn_params(ks):
            return {
                "wq": rnd(ks[0], (H, D, hd)), "bq": rnd(ks[1], (H, 1, hd), 0.1),
                "wk": rnd(ks[2], (H, D, hd)), "bk": rnd(ks[3], (H, 1, hd), 0.1),
                "wv": rnd(ks[4], (H, D, hd)), "bv": rnd(ks[5], (H, 1, hd), 0.1),
                "wo": rnd(ks[6], (H, hd, D)), "bo": rnd(ks[7], (1, D), 0.1),
                "ln_g": 1.0 + rnd(ks[8], (1, D), 0.1),
                "ln_b": rnd(ks[9], (1, D), 0.1),
            }

        params["layers"].append({
            "self_attn": attn_params(lk[0:10]),
            "cross_attn": attn_params(lk[10:20]),
            "ffn": {
                "w1": rnd(lk[20], (D, ffn_dim)), "b1": rnd(lk[21], (1, ffn_dim), 0.1),
                "w2": rnd(lk[22], (ffn_dim, D)), "b2": rnd(lk[23], (1, D), 0.1),
                "ln_g": 1.0 + rnd(lk[24], (1, D), 0.1),
                "ln_b": rnd(lk[25], (1, D), 0.1),
            },
        })
    return params


if __name__ == "__main__":
    # Small shapes consistent with the module; d_model=128 keeps the feature
    # axis lane-dense (multiple of 128).
    B, T, S = 2, 8, 16
    D, H, FFN, L = 128, 4, 256, 2
    VOCAB, MAX_POS, OFFSET = 96, 64, 2
    EMBED_SCALE = math.sqrt(D)   # config.scale_embedding=True

    key = jax.random.PRNGKey(0)
    kp, kid, kenc = jax.random.split(key, 3)
    params = init_params(kp, vocab=VOCAB, max_pos=MAX_POS, pos_offset=OFFSET,
                         D=D, H=H, ffn_dim=FFN, L=L)

    input_ids = jax.random.randint(kid, (B, T), 0, VOCAB)
    encoder_hidden_states = jax.random.normal(kenc, (B, S, D), dtype=jnp.float32)

    # decoder_padding_mask: True where padded (tail padding, as in BART).
    dec_lens = jnp.array([T, T - 2])
    decoder_padding_mask = jnp.arange(T)[None, :] >= dec_lens[:, None]
    # encoder attention mask: 1 = keep, 0 = pad (inverted à la invert_mask).
    enc_lens = jnp.array([S, S - 4])
    encoder_attention_mask = (jnp.arange(S)[None, :] < enc_lens[:, None]
                              ).astype(jnp.int32)

    out = bart_decoder_forward(params, input_ids, encoder_hidden_states,
                               encoder_attention_mask, decoder_padding_mask,
                               embed_scale=EMBED_SCALE, pos_offset=OFFSET)
    out = jax.block_until_ready(out)

    ref = _reference_forward(params, input_ids, encoder_hidden_states,
                             encoder_attention_mask, decoder_padding_mask,
                             embed_scale=EMBED_SCALE, pos_offset=OFFSET)
    np.testing.assert_allclose(np.asarray(out), np.asarray(ref),
                               rtol=1e-2, atol=1e-2)
    assert out.shape == (B, T, D)
    print("KERNEL_OK")
</pallas_src>

<mosaic_0001>
module attributes {stable_mosaic.version = 11 : i64} {
  func.func @_embed_ln_kernel(%arg0: i32, %arg1: memref<1x8x128xf32, #tpu.memory_space<vmem>>, %arg2: memref<8x128xf32, #tpu.memory_space<vmem>>, %arg3: memref<1x128xf32, #tpu.memory_space<vmem>>, %arg4: memref<1x128xf32, #tpu.memory_space<vmem>>, %arg5: memref<1x8x128xf32, #tpu.memory_space<vmem>>) attributes {dimension_semantics = [#tpu.dimension_semantics<parallel>], iteration_bounds = array<i64: 2>, scalar_prefetch = 0 : i64, scratch_operands = 0 : i64, tpu.core_type = #tpu.core_type<tc>, window_params = [{transform_indices = @transform_0, window_bounds = array<i64: 1, 8, 128>}, {pipeline_mode = #tpu.pipeline_mode<synchronous>, transform_indices = @transform_1, window_bounds = array<i64: 8, 128>}, {pipeline_mode = #tpu.pipeline_mode<synchronous>, transform_indices = @transform_2, window_bounds = array<i64: 1, 128>}, {pipeline_mode = #tpu.pipeline_mode<synchronous>, transform_indices = @transform_3, window_bounds = array<i64: 1, 128>}, {transform_indices = @transform_4, window_bounds = array<i64: 1, 8, 128>}]} {
    %c0 = arith.constant 0 : index
    %c0_0 = arith.constant 0 : index
    %c0_1 = arith.constant 0 : index
    %0 = vector.load %arg1[%c0, %c0_0, %c0_1] : memref<1x8x128xf32, #tpu.memory_space<vmem>>, vector<1x8x128xf32>
    %1 = vector.shape_cast %0 : vector<1x8x128xf32> to vector<8x128xf32>
    %cst = arith.constant 11.3137083 : f32
    %2 = vector.broadcast %cst : f32 to vector<8x128xf32>
    %3 = arith.mulf %1, %2 : vector<8x128xf32>
    %c0_2 = arith.constant 0 : index
    %c0_3 = arith.constant 0 : index
    %4 = vector.load %arg2[%c0_2, %c0_3] : memref<8x128xf32, #tpu.memory_space<vmem>>, vector<8x128xf32>
    %5 = arith.addf %3, %4 : vector<8x128xf32>
    %c0_4 = arith.constant 0 : index
    %c0_5 = arith.constant 0 : index
    %6 = vector.load %arg3[%c0_4, %c0_5] : memref<1x128xf32, #tpu.memory_space<vmem>>, vector<1x128xf32>
    %c0_6 = arith.constant 0 : index
    %c0_7 = arith.constant 0 : index
    %7 = vector.load %arg4[%c0_6, %c0_7] : memref<1x128xf32, #tpu.memory_space<vmem>>, vector<1x128xf32>
    %cst_8 = arith.constant dense<0.000000e+00> : vector<8xf32>
    %8 = vector.multi_reduction <add>, %5, %cst_8 [1] : vector<8x128xf32> to vector<8xf32>
    %9 = vector.shape_cast %8 : vector<8xf32> to vector<8x1xf32>
    %cst_9 = arith.constant 1.280000e+02 : f32
    %10 = vector.broadcast %cst_9 : f32 to vector<8x1xf32>
    %11 = arith.divf %9, %10 : vector<8x1xf32>
    %12 = vector.broadcast %11 : vector<8x1xf32> to vector<8x128xf32>
    %13 = arith.subf %5, %12 : vector<8x128xf32>
    %14 = arith.mulf %13, %13 : vector<8x128xf32>
    %cst_10 = arith.constant dense<0.000000e+00> : vector<8xf32>
    %15 = vector.multi_reduction <add>, %14, %cst_10 [1] : vector<8x128xf32> to vector<8xf32>
    %16 = vector.shape_cast %15 : vector<8xf32> to vector<8x1xf32>
    %cst_11 = arith.constant 1.280000e+02 : f32
    %17 = vector.broadcast %cst_11 : f32 to vector<8x1xf32>
    %18 = arith.divf %16, %17 : vector<8x1xf32>
    %19 = vector.broadcast %11 : vector<8x1xf32> to vector<8x128xf32>
    %20 = arith.subf %5, %19 : vector<8x128xf32>
    %cst_12 = arith.constant 9.99999974E-6 : f32
    %21 = vector.broadcast %cst_12 : f32 to vector<8x1xf32>
    %22 = arith.addf %18, %21 : vector<8x1xf32>
    %23 = math.rsqrt %22 : vector<8x1xf32>
    %24 = vector.broadcast %23 : vector<8x1xf32> to vector<8x128xf32>
    %25 = arith.mulf %20, %24 : vector<8x128xf32>
    %26 = vector.broadcast %6 : vector<1x128xf32> to vector<8x128xf32>
    %27 = arith.mulf %25, %26 : vector<8x128xf32>
    %28 = vector.broadcast %7 : vector<1x128xf32> to vector<8x128xf32>
    %29 = arith.addf %27, %28 : vector<8x128xf32>
    %c0_13 = arith.constant 0 : index
    %c0_14 = arith.constant 0 : index
    %c0_15 = arith.constant 0 : index
    %30 = vector.load %arg5[%c0_13, %c0_14, %c0_15] : memref<1x8x128xf32, #tpu.memory_space<vmem>>, vector<1x8x128xf32>
    %31 = vector.shape_cast %30 : vector<1x8x128xf32> to vector<8x128xf32>
    %32 = vector.shape_cast %29 : vector<8x128xf32> to vector<1x8x128xf32>
    tpu.vector_store %arg5[%c0_13, %c0_14, %c0_15], %32 {strides = array<i32>} : memref<1x8x128xf32, #tpu.memory_space<vmem>>, vector<1x8x128xf32>,
    return
  }
  func.func @transform_0(%arg0: i32) -> (i32, i32, i32) {
    %c0_i32 = arith.constant 0 : i32
    %c0_i32_0 = arith.constant 0 : i32
    %c0_i32_1 = arith.constant 0 : i32
    return %arg0, %c0_i32, %c0_i32_0 : i32, i32, i32
  }
  func.func @transform_1(%arg0: i32) -> (i32, i32) {
    %c0_i32 = arith.constant 0 : i32
    %c0_i32_0 = arith.constant 0 : i32
    %c0_i32_1 = arith.constant 0 : i32
    return %c0_i32, %c0_i32_0 : i32, i32
  }
  func.func @transform_2(%arg0: i32) -> (i32, i32) {
    %c0_i32 = arith.constant 0 : i32
    %c0_i32_0 = arith.constant 0 : i32
    %c0_i32_1 = arith.constant 0 : i32
    return %c0_i32, %c0_i32_0 : i32, i32
  }
  func.func @transform_3(%arg0: i32) -> (i32, i32) {
    %c0_i32 = arith.constant 0 : i32
    %c0_i32_0 = arith.constant 0 : i32
    %c0_i32_1 = arith.constant 0 : i32
    return %c0_i32, %c0_i32_0 : i32, i32
  }
  func.func @transform_4(%arg0: i32) -> (i32, i32, i32) {
    %c0_i32 = arith.constant 0 : i32
    %c0_i32_0 = arith.constant 0 : i32
    %c0_i32_1 = arith.constant 0 : i32
    return %arg0, %c0_i32, %c0_i32_0 : i32, i32, i32
  }
}

</mosaic_0001>

<llo_original>
// kernel: tpu_custom_call.1
$region0: #{tpu_custom_call.1}
  #allocation0 [shape = 'u32[]', space=smem, size = 0x4, offset = 0x4, fixed_abs, tag = 'smem constant byte address 0x4 - core index']
  #allocation1 [shape = 'u32[144,128]{1,0:T(1,128)}', space=vmem, size = 0x12000, scoped, tag = 'internal scratch']
  %s0 = inlined_call_operand.hbm [shape: f32[2,8,128], index: 0, kind: input, shape index: {}]
  %s1 = inlined_call_operand.hbm [shape: f32[8,128], index: 1, kind: input, shape index: {}]
  %s2 = inlined_call_operand.vmem [shape: f32[1,128], index: 2, kind: input, shape index: {}]
  %s3 = inlined_call_operand.vmem [shape: f32[1,128], index: 3, kind: input, shape index: {}]
  %s4 = inlined_call_operand.hbm [shape: f32[2,8,128], index: 4, kind: output, shape index: {}]
  %s5 = sld [smem:[#allocation0]]
  $region57: #{tpu_custom_call.1} parent=0
    _
  %s7 = ssub.s32 1, %s5
  %s8 = scalar_select 0, %s7, %s5
  $region1: #{tpu_custom_call.1} parent=0
    #allocation2 [shape = 'u8[8192]{0}', space=vmem, size = 0x2000, scoped, tag = 'input window, operand 0']
    #allocation3 [shape = 's32[2]{0}', space=sflag, size = 0x8, scoped, tag = 'scoped memory for tpu_custom_call.1']
    #allocation4 [shape = 's32[2]{0}', space=sflag, size = 0x8, scoped, tag = 'scoped memory for tpu_custom_call.1']
    #allocation5 [shape = 'u8[4096]{0}', space=vmem, size = 0x1000, scoped, tag = 'input window, operand 1, single buffered']
    #allocation6 [shape = 's32[1]{0}', space=sflag, size = 0x4, scoped, tag = 'scoped memory for tpu_custom_call.1']
    #allocation7 [shape = 'u8[8192]{0}', space=vmem, size = 0x2000, scoped, tag = 'output window, operand 0']
    %9 = vsyncpa [#allocation3], 0
    %s10 = scalar_lea.sflag [#allocation3], 1
    %11 = vsyncpa %s10, 0
    %12 = vsyncpa [#allocation6], 0
    %13 = vsyncpa [#allocation4], 0
    %s14 = scalar_lea.sflag [#allocation4], 1
    %15 = vsyncpa %s14, 0
    loop: start=0, step=1, limit=4
    $region2: #{tpu_custom_call.1} parent=1 // loop_pre_header
      _
    $region3: #{tpu_custom_call.1} parent=1 // loop_header
      %s17 = sphi 0, %s21
      %p18 = scmp.ge.s32.totalorder %s17, 4
      %s27 = sphi 0, %s29
      %s30 = sphi 0, %s27
      %s31 = sphi 0, %s30
      %s47 = sphi 0, %s31
      %s51 = sphi 0, %s51
      %s53 = sphi 0, %s51
      %s54 = sphi 0, %s53
      %s68 = sphi 0, %s54
      %s72 = sphi 0, %s72
      %s74 = sphi 0, %s72
      %s75 = sphi 0, %s74
      %s89 = sphi 0, %s75
      %s93 = sphi 0, %s93
      %s95 = sphi 0, %s93
      %s96 = sphi 0, %s95
      %s110 = sphi 0, %s96
      %s116 = sphi 0, %s118
      %s119 = sphi 0, %s116
      %s120 = sphi 0, %s119
      %s136 = sphi 0, %s120
    $region4: #{tpu_custom_call.1} parent=1 // loop_header_branch
      %20 = sbr.rel (%p18) target = $region8
    $region5: #{tpu_custom_call.1} parent=1 // loop_body
      %s22 = ssub.s32 %s17, 1
      %s23 = ssub.s32 %s17, 2
      %s24 = sadd.s32 %s17, 1
      %s25 = ssub.s32 %s17, %s24
      %p26 = scmp.eq.s32.totalorder %s25, 0
      %s28 = sadd.s32 %s27, 1
      %s29 = scalar_select %p26, %s27, %s28
      %p32 = pneg %p26
      %p33 = scmp.eq.s32.totalorder %s17, 1
      %p34 = por %p32, %p33
      %p35 = scmp.ne.s32.totalorder %s27, %s30
      %p36 = scmp.eq.s32.totalorder %s17, 0
      %p37 = por %p35, %p36
      %p38 = scmp.ne.s32.totalorder %s27, %s30
      %p39 = scmp.eq.s32.totalorder %s22, 1
      %p40 = por %p38, %p39
      %p41 = scmp.ne.s32.totalorder %s30, %s31
      %p42 = scmp.eq.s32.totalorder %s22, 0
      %p43 = por %p41, %p42
      %p44 = scmp.ne.s32.totalorder %s30, %s31
      %p45 = scmp.eq.s32.totalorder %s23, 1
      %p46 = por %p44, %p45
      %p48 = scmp.ne.s32.totalorder %s31, %s47
      %p49 = scmp.eq.s32.totalorder %s23, 0
      %p50 = por %p48, %p49
      %s52 = sadd.s32 %s51, 1
      %p55 = scmp.eq.s32.totalorder %s17, 1
      %p56 = scmp.ne.s32.totalorder %s51, %s53
      %p57 = scmp.eq.s32.totalorder %s17, 0
      %p58 = por %p56, %p57
      %p59 = scmp.ne.s32.totalorder %s51, %s53
      %p60 = scmp.eq.s32.totalorder %s22, 1
      %p61 = por %p59, %p60
      %p62 = scmp.ne.s32.totalorder %s53, %s54
      %p63 = scmp.eq.s32.totalorder %s22, 0
      %p64 = por %p62, %p63
      %p65 = scmp.ne.s32.totalorder %s53, %s54
      %p66 = scmp.eq.s32.totalorder %s23, 1
      %p67 = por %p65, %p66
      %p69 = scmp.ne.s32.totalorder %s54, %s68
      %p70 = scmp.eq.s32.totalorder %s23, 0
      %p71 = por %p69, %p70
      %s73 = sadd.s32 %s72, 1
      %p76 = scmp.eq.s32.totalorder %s17, 1
      %p77 = scmp.ne.s32.totalorder %s72, %s74
      %p78 = scmp.eq.s32.totalorder %s17, 0
      %p79 = por %p77, %p78
      %p80 = scmp.ne.s32.totalorder %s72, %s74
      %p81 = scmp.eq.s32.totalorder %s22, 1
      %p82 = por %p80, %p81
      %p83 = scmp.ne.s32.totalorder %s74, %s75
      %p84 = scmp.eq.s32.totalorder %s22, 0
      %p85 = por %p83, %p84
      %p86 = scmp.ne.s32.totalorder %s74, %s75
      %p87 = scmp.eq.s32.totalorder %s23, 1
      %p88 = por %p86, %p87
      %p90 = scmp.ne.s32.totalorder %s75, %s89
      %p91 = scmp.eq.s32.totalorder %s23, 0
      %p92 = por %p90, %p91
      %s94 = sadd.s32 %s93, 1
      %p97 = scmp.eq.s32.totalorder %s17, 1
      %p98 = scmp.ne.s32.totalorder %s93, %s95
      %p99 = scmp.eq.s32.totalorder %s17, 0
      %p100 = por %p98, %p99
      %p101 = scmp.ne.s32.totalorder %s93, %s95
      %p102 = scmp.eq.s32.totalorder %s22, 1
      %p103 = por %p101, %p102
      %p104 = scmp.ne.s32.totalorder %s95, %s96
      %p105 = scmp.eq.s32.totalorder %s22, 0
      %p106 = por %p104, %p105
      %p107 = scmp.ne.s32.totalorder %s95, %s96
      %p108 = scmp.eq.s32.totalorder %s23, 1
      %p109 = por %p107, %p108
      %p111 = scmp.ne.s32.totalorder %s96, %s110
      %p112 = scmp.eq.s32.totalorder %s23, 0
      %p113 = por %p111, %p112
      %s114 = ssub.s32 %s17, %s24
      %p115 = scmp.eq.s32.totalorder %s114, 0
      %s117 = sadd.s32 %s116, 1
      %s118 = scalar_select %p115, %s116, %s117
      %p121 = pneg %p115
      %p122 = scmp.eq.s32.totalorder %s17, 1
      %p123 = por %p121, %p122
      %p124 = scmp.ne.s32.totalorder %s116, %s119
      %p125 = scmp.eq.s32.totalorder %s17, 0
      %p126 = por %p124, %p125
      %p127 = scmp.ne.s32.totalorder %s116, %s119
      %p128 = scmp.eq.s32.totalorder %s22, 1
      %p129 = por %p127, %p128
      %p130 = scmp.ne.s32.totalorder %s119, %s120
      %p131 = scmp.eq.s32.totalorder %s22, 0
      %p132 = por %p130, %p131
      %p133 = scmp.ne.s32.totalorder %s119, %s120
      %p134 = scmp.eq.s32.totalorder %s23, 1
      %p135 = por %p133, %p134
      %p137 = scmp.ne.s32.totalorder %s120, %s136
      %p138 = scmp.eq.s32.totalorder %s23, 0
      %p139 = por %p137, %p138
      %p140 = scmp.le.s32.totalorder 1, %s17
      %p141 = scmp.lt.s32.totalorder %s17, 3
      %p142 = pnand %p140, %p141
      %p143 = pneg %p142
      // Predicated region
      $region9: #{tpu_custom_call.1} parent=5 // pred_check
        _
      $region10: #{tpu_custom_call.1} parent=5 // pred_check_branch
        %145 = sbr.rel (%p142) target = $region12
      $region11: #{tpu_custom_call.1} parent=5 // pred_region
        %s146 = ssub.s32 %s17, 1
        // Predicated region
        $region13: #{tpu_custom_call.1} parent=11 // pred_check
          %p147 = pneg %p64
        $region14: #{tpu_custom_call.1} parent=11 // pred_check_branch
          %149 = sbr.rel (%p147) target = $region16
        $region15: #{tpu_custom_call.1} parent=11 // pred_region
          %s151 = ssub.s32 128, 128
          %152 = vsyncadd [#allocation6], %s151
          %s154 = sshll.u32 [#allocation5], 4
          %s155 = int_to_ptr.vmem [resolvable:$true] %s154
          %157 = dma.hbm_to_vmem [thread:$0]  %s1, 128, %s155, [#allocation6]
        $region16: #{tpu_custom_call.1} parent=11 // pred_fallthru
          _
        // Predicated region
        $region17: #{tpu_custom_call.1} parent=11 // pred_check
          %p158 = pneg %p85
        $region18: #{tpu_custom_call.1} parent=11 // pred_check_branch
          %160 = sbr.rel (%p158) target = $region20
        $region19: #{tpu_custom_call.1} parent=11 // pred_region
          _
        $region20: #{tpu_custom_call.1} parent=11 // pred_fallthru
          _
        // Predicated region
        $region21: #{tpu_custom_call.1} parent=11 // pred_check
          %p161 = pneg %p106
        $region22: #{tpu_custom_call.1} parent=11 // pred_check_branch
          %163 = sbr.rel (%p161) target = $region24
        $region23: #{tpu_custom_call.1} parent=11 // pred_region
          _
        $region24: #{tpu_custom_call.1} parent=11 // pred_fallthru
          _
      $region12: #{tpu_custom_call.1} parent=5 // pred_fallthru
        _
      %p164 = scmp.lt.s32.totalorder %s17, 2
      // Predicated region
      $region25: #{tpu_custom_call.1} parent=5 // pred_check
        %p165 = pneg %p164
      $region26: #{tpu_custom_call.1} parent=5 // pred_check_branch
        %167 = sbr.rel (%p165) target = $region28
      $region27: #{tpu_custom_call.1} parent=5 // pred_region
        // Predicated region
        $region29: #{tpu_custom_call.1} parent=27 // pred_check
          %p168 = pneg %p37
        $region30: #{tpu_custom_call.1} parent=27 // pred_check_branch
          %170 = sbr.rel (%p168) target = $region32
        $region31: #{tpu_custom_call.1} parent=27 // pred_region
          %s171 = sand.u32 %s27, 1
          %s172 = scalar_lea.sflag [#allocation3], %s171
          %s173 = sand.u32 %s27, 1
          %s174 = smul.addr %s173, 8
          %s175 = scalar_lea.vmem [#allocation2], %s174
          %s177 = ssub.s32 128, 128
          %178 = vsyncadd %s172, %s177
          %s179 = smul.addr %s17, 128
          %s180 = scalar_lea.hbm %s0, %s179
          %s182 = sshll.u32 %s175, 4
          %s183 = int_to_ptr.vmem [resolvable:$true] %s182
          %185 = dma.hbm_to_vmem [thread:$0]  %s180, 128, %s183, %s172
        $region32: #{tpu_custom_call.1} parent=27 // pred_fallthru
          _
      $region28: #{tpu_custom_call.1} parent=5 // pred_fallthru
        _
      %p186 = scmp.le.s32.totalorder 1, %s17
      %p187 = scmp.lt.s32.totalorder %s17, 3
      %p188 = pnand %p186, %p187
      %p189 = pneg %p188
      // Predicated region
      $region33: #{tpu_custom_call.1} parent=5 // pred_check
        _
      $region34: #{tpu_custom_call.1} parent=5 // pred_check_branch
        %191 = sbr.rel (%p188) target = $region36
      $region35: #{tpu_custom_call.1} parent=5 // pred_region
        %s192 = ssub.s32 %s17, 1
        %s193 = sand.u32 %s30, 1
        %s194 = scalar_lea.sflag [#allocation3], %s193
        %s195 = sand.u32 %s30, 1
        %s196 = smul.addr %s195, 8
        %s197 = scalar_lea.vmem [#allocation2], %s196
        // Predicated region
        $region37: #{tpu_custom_call.1} parent=35 // pred_check
          %p198 = pneg %p43
        $region38: #{tpu_custom_call.1} parent=35 // pred_check_branch
          %200 = sbr.rel (%p198) target = $region40
        $region39: #{tpu_custom_call.1} parent=35 // pred_region
          %201 = dma.done %s194, 128
        $region40: #{tpu_custom_call.1} parent=35 // pred_fallthru
          _
        // Predicated region
        $region41: #{tpu_custom_call.1} parent=35 // pred_check
          %p202 = pneg %p64
        $region42: #{tpu_custom_call.1} parent=35 // pred_check_branch
          %204 = sbr.rel (%p202) target = $region44
        $region43: #{tpu_custom_call.1} parent=35 // pred_region
          %205 = dma.done [#allocation6], 128
        $region44: #{tpu_custom_call.1} parent=35 // pred_fallthru
          _
        %s206 = sand.u32 %s30, 1
        %s207 = scalar_lea.sflag [#allocation3], %s206
        %s208 = sand.u32 %s30, 1
        %s209 = smul.addr %s208, 8
        %s210 = scalar_lea.vmem [#allocation2], %s209
        %p211 = pneg %p43
        %p212 = pneg %p40
        %p213 = pneg %p64
        %p214 = pneg %p61
        %p215 = pneg %p85
        %p216 = pneg %p82
        %p217 = pneg %p106
        %p218 = pneg %p103
        %p219 = pneg %p132
        %p220 = pneg %p129
        %s221 = sand.u32 %s119, 1
        %s222 = scalar_lea.sflag [#allocation4], %s221
        %s223 = sand.u32 %s119, 1
        %s224 = smul.addr %s223, 8
        %s225 = scalar_lea.vmem [#allocation7], %s224
        %v226 = vld [vmem:[%s197] sm:$0xff]
        %v227 = vmul.f32 %v226, 11.313708
        %v228 = vld [vmem:[#allocation5] sm:$0xff]
        %v229 = vadd.f32 %v227, %v228
        %v230 = vld [vmem:[%s2] sm:$0x1]
        %v231 = vld [vmem:[%s3] sm:$0x1]
        %232 = vadd.xlane.f32.xlu0 %v229
        %v233 = vpop.xlane.xlu0 %232
        %v234 = vrcp.pop 128.0
        %v235 = vmul.f32 %v233, %v234
        %v236 = vsub.f32 %v229, %v235
        %v237 = vmul.f32 %v236, %v236
        %238 = vadd.xlane.f32.xlu0 %v237
        %v239 = vpop.xlane.xlu0 %238
        %v240 = vmul.f32 %v239, %v234
        %v241 = vadd.f32 %v240, 1e-05
        %v242 = vrsqrt.pop %v241
        %v243 = vmul.f32 %v236, %v242
        %v245 = vlaneseq
        %v246 = vshrl.u32 %v245, 7
        %v247 = vsub.s32 0, %v246
        %v248 = vrot.slane %v230, %v247
        %v250 = vmul.f32 %v243, %v248
        %v252 = vlaneseq
        %v253 = vshrl.u32 %v252, 7
        %v254 = vsub.s32 0, %v253
        %v255 = vrot.slane %v231, %v254
        %v257 = vadd.f32 %v250, %v255
        %258 = vst [vmem:[%s225] sm:$0xff] %v257
        %s259 = sand.u32 %s119, 1
        %s260 = scalar_lea.sflag [#allocation4], %s259
        %s261 = sand.u32 %s119, 1
        %s262 = smul.addr %s261, 8
        %s263 = scalar_lea.vmem [#allocation7], %s262
        // Predicated region
        $region45: #{tpu_custom_call.1} parent=35 // pred_check
          %p264 = pneg %p129
        $region46: #{tpu_custom_call.1} parent=35 // pred_check_branch
          %266 = sbr.rel (%p264) target = $region48
        $region47: #{tpu_custom_call.1} parent=35 // pred_region
          %s268 = ssub.s32 128, 128
          %269 = vsyncadd %s260, %s268
          %s270 = smul.addr %s22, 128
          %s271 = scalar_lea.hbm %s4, %s270
          %s273 = sshll.u32 %s263, 4
          %s274 = int_to_ptr.vmem [resolvable:$true] %s273
          %276 = dma.vmem_to_hbm [thread:$0]  %s274, 128, %s271, %s260
        $region48: #{tpu_custom_call.1} parent=35 // pred_fallthru
          _
      $region36: #{tpu_custom_call.1} parent=5 // pred_fallthru
        _
      %p277 = scmp.le.s32.totalorder 2, %s17
      // Predicated region
      $region49: #{tpu_custom_call.1} parent=5 // pred_check
        %p278 = pneg %p277
      $region50: #{tpu_custom_call.1} parent=5 // pred_check_branch
        %280 = sbr.rel (%p278) target = $region52
      $region51: #{tpu_custom_call.1} parent=5 // pred_region
        %s281 = ssub.s32 %s17, 2
        // Predicated region
        $region53: #{tpu_custom_call.1} parent=51 // pred_check
          %p282 = pneg %p135
        $region54: #{tpu_custom_call.1} parent=51 // pred_check_branch
          %284 = sbr.rel (%p282) target = $region56
        $region55: #{tpu_custom_call.1} parent=51 // pred_region
          %s285 = sand.u32 %s120, 1
          %s286 = scalar_lea.sflag [#allocation4], %s285
          %s287 = sand.u32 %s120, 1
          %s288 = smul.addr %s287, 8
          %s289 = scalar_lea.vmem [#allocation7], %s288
          %290 = dma.done %s286, 128
        $region56: #{tpu_custom_call.1} parent=51 // pred_fallthru
          _
      $region52: #{tpu_custom_call.1} parent=5 // pred_fallthru
        _
    $region6: #{tpu_custom_call.1} parent=1 // loop_footer
      %s21 = sadd.s32 1, %s17
    $region7: #{tpu_custom_call.1} parent=1 // loop_footer_branch
      %16 = sbr.rel target = $region3
    $region8: #{tpu_custom_call.1} parent=1 // loop_exit
      _
    %291 = vsyncpa [#allocation3], 1
    %s292 = scalar_lea.sflag [#allocation3], 1
    %293 = vsyncpa %s292, 1
    %294 = vsyncpa [#allocation6], 1
    %295 = vsyncpa [#allocation4], 1
    %s296 = scalar_lea.sflag [#allocation4], 1
    %297 = vsyncpa %s296, 1

</llo_original>
